<compile_context>
chip_gen: v7x
topology: tpu7x:2x2x1
jax: 0.10.0
libtpu: 0.0.40
codegen_flags: <defaults>
</compile_context>

<pallas_src>
import functools

import jax
import jax.numpy as jnp
from jax.experimental import pallas as pl
from jax.experimental.pallas import tpu as pltpu


_NEG_PAD = -1e30  # padded-class logit: exp() underflows to 0, lse unchanged


def _round_up(n: int, m: int) -> int:
    return ((n + m - 1) // m) * m


def _fc_classifier_kernel(x_ref, w_ref, b_ref, o_ref):
    # Single folded matmul: [TB, I](bf16) @ [I, CP](bf16) -> f32 accumulate.
    logits = jnp.dot(x_ref[...], w_ref[...], preferred_element_type=jnp.float32)
    logits = logits + b_ref[...]  # bias in f32 (padded classes hold -1e30)

    # log_softmax over the full (padded) class axis, numerically stable.
    # Padded columns are ~-1e30 so they contribute 0 to the sum-exp.
    m = jnp.max(logits, axis=1, keepdims=True)
    shifted = logits - m
    lse = jnp.log(jnp.sum(jnp.exp(shifted), axis=1, keepdims=True))
    o_ref[...] = shifted - lse


@functools.partial(jax.jit, static_argnames=("block_b",))
def fully_connected_classifier(x, w1, b1, w2, b2, *, block_b: int = 512):
    """x: [B, I]; w1: [I, H]; b1: [H]; w2: [H, C]; b2: [C] -> [B, C] log-probs.

    Weights are stored pre-transposed ([in_features, out_features]) relative
    to PyTorch's nn.Linear weight layout.
    """
    B, I = x.shape
    C = w2.shape[1]

    # --- fold fc1 + fc2 (exact for inference: dropout == identity, no act.) ---
    # (In a real deployment fold once outside jit; it is tiny either way.)
    w_folded = jnp.dot(w1.astype(jnp.float32), w2.astype(jnp.float32))          # [I, C]
    b_folded = jnp.dot(b1.astype(jnp.float32), w2.astype(jnp.float32)) \
        + b2.astype(jnp.float32)                                                 # [C]

    # --- pad class axis to a lane-dense width (multiple of 128) ---
    CP = _round_up(max(C, 128), 128)
    w_pad = jnp.zeros((I, CP), jnp.float32).at[:, :C].set(w_folded)
    b_pad = jnp.full((1, CP), jnp.float32(_NEG_PAD)).at[0, :C].set(b_folded)

    # --- batch tiling (TB multiple of 16 for bf16 sublane packing) ---
    TB = min(block_b, _round_up(B, 16))
    TB = _round_up(TB, 16)
    BP = _round_up(B, TB)
    x_pad = jnp.zeros((BP, I), jnp.bfloat16).at[:B, :].set(x.astype(jnp.bfloat16))

    grid = (BP // TB,)

    out = pl.pallas_call(
        _fc_classifier_kernel,
        out_shape=jax.ShapeDtypeStruct((BP, CP), jnp.float32),
        grid_spec=pltpu.PrefetchScalarGridSpec(
            num_scalar_prefetch=0,
            grid=grid,
            in_specs=[
                # x: tiled along batch
                pl.BlockSpec((TB, I), lambda i: (i, 0)),
                # folded weight: VMEM-resident across all grid steps
                pl.BlockSpec((I, CP), lambda i: (0, 0)),
                # folded (padded) bias: VMEM-resident
                pl.BlockSpec((1, CP), lambda i: (0, 0)),
            ],
            out_specs=pl.BlockSpec((TB, CP), lambda i: (i, 0)),
        ),
        compiler_params=pltpu.CompilerParams(
            dimension_semantics=("parallel",),
            # tiles are tiny (<1 MiB even double-buffered); stay well inside
            # v7x's 64 MiB physical VMEM
            vmem_limit_bytes=32 * 1024 * 1024,
        ),
    )(x_pad, w_pad.astype(jnp.bfloat16), b_pad)

    # strip batch / class padding
    return out[:B, :C]


def _reference(x, w1, b1, w2, b2):
    logits = (x @ w1 + b1) @ w2 + b2
    return jax.nn.log_softmax(logits, axis=1)


if __name__ == "__main__":
    # Sizes implied by the module:
    #   input_size  = filter_counts[2]  -> 32
    #   hidden_layer_size               -> 64
    #   num_class                       -> 8
    B, I, H, C = 8, 32, 64, 8

    key = jax.random.PRNGKey(0)
    kx, kw1, kb1, kw2, kb2 = jax.random.split(key, 5)

    x = jax.random.normal(kx, (B, I), dtype=jnp.float32)

    # Deterministic Linear-style init (uniform +-1/sqrt(fan_in)), weights
    # stored pre-transposed as [in_features, out_features].
    lim1 = 1.0 / jnp.sqrt(jnp.float32(I))
    w1 = jax.random.uniform(kw1, (I, H), minval=-lim1, maxval=lim1, dtype=jnp.float32)
    b1 = jax.random.uniform(kb1, (H,), minval=-lim1, maxval=lim1, dtype=jnp.float32)

    lim2 = 1.0 / jnp.sqrt(jnp.float32(H))
    w2 = jax.random.uniform(kw2, (H, C), minval=-lim2, maxval=lim2, dtype=jnp.float32)
    b2 = jax.random.uniform(kb2, (C,), minval=-lim2, maxval=lim2, dtype=jnp.float32)

    # --- run 1: the module's own shape (single grid step) ---
    out = fully_connected_classifier(x, w1, b1, w2, b2)
    out = jax.block_until_ready(out)
    ref = _reference(x, w1, b1, w2, b2)
    assert out.shape == (B, C)
    # bf16 operands -> loose tolerance vs. the f32 two-matmul reference
    assert jnp.allclose(out, ref, atol=5e-2, rtol=5e-2), \
        float(jnp.max(jnp.abs(out - ref)))
    # log-probs sum to 1 in prob space
    assert jnp.allclose(jnp.sum(jnp.exp(out), axis=1), 1.0, atol=1e-3)

    # --- run 2: non-multiple batch to exercise the batch grid (>1 step) ---
    B2 = 40
    x2 = jax.random.normal(jax.random.PRNGKey(1), (B2, I), dtype=jnp.float32)
    out2 = fully_connected_classifier(x2, w1, b1, w2, b2, block_b=16)
    out2 = jax.block_until_ready(out2)
    ref2 = _reference(x2, w1, b1, w2, b2)
    assert out2.shape == (B2, C)
    assert jnp.allclose(out2, ref2, atol=5e-2, rtol=5e-2), \
        float(jnp.max(jnp.abs(out2 - ref2)))

    print("KERNEL_OK")
</pallas_src>

<mosaic_0001>
module attributes {stable_mosaic.version = 11 : i64} {
  func.func @_fc_classifier_kernel(%arg0: i32, %arg1: memref<16x32xbf16, #tpu.memory_space<vmem>>, %arg2: memref<32x128xbf16, #tpu.memory_space<vmem>>, %arg3: memref<1x128xf32, #tpu.memory_space<vmem>>, %arg4: memref<16x128xf32, #tpu.memory_space<vmem>>) attributes {dimension_semantics = [#tpu.dimension_semantics<parallel>], iteration_bounds = array<i64: 1>, scalar_prefetch = 0 : i64, scratch_operands = 0 : i64, tpu.core_type = #tpu.core_type<tc>, window_params = [{transform_indices = @transform_0, window_bounds = array<i64: 16, 32>}, {pipeline_mode = #tpu.pipeline_mode<synchronous>, transform_indices = @transform_1, window_bounds = array<i64: 32, 128>}, {pipeline_mode = #tpu.pipeline_mode<synchronous>, transform_indices = @transform_2, window_bounds = array<i64: 1, 128>}, {transform_indices = @transform_3, window_bounds = array<i64: 16, 128>}]} {
    %c0 = arith.constant 0 : index
    %c0_0 = arith.constant 0 : index
    %0 = vector.load %arg1[%c0, %c0_0] : memref<16x32xbf16, #tpu.memory_space<vmem>>, vector<16x32xbf16>
    %c0_1 = arith.constant 0 : index
    %c0_2 = arith.constant 0 : index
    %1 = vector.load %arg2[%c0_1, %c0_2] : memref<32x128xbf16, #tpu.memory_space<vmem>>, vector<32x128xbf16>
    %cst = arith.constant dense<0.000000e+00> : vector<16x128xf32>
    %2 = tpu.matmul %0, %1, %cst {dimension_numbers = #tpu.dot_dimension_numbers<[1], [0], [0], [1], [0, 0, 1, 1], [], []>} : vector<16x32xbf16>, vector<32x128xbf16>, vector<16x128xf32> -> vector<16x128xf32>
    %c0_3 = arith.constant 0 : index
    %c0_4 = arith.constant 0 : index
    %3 = vector.load %arg3[%c0_3, %c0_4] : memref<1x128xf32, #tpu.memory_space<vmem>>, vector<1x128xf32>
    %4 = vector.broadcast %3 : vector<1x128xf32> to vector<16x128xf32>
    %5 = arith.addf %2, %4 : vector<16x128xf32>
    %cst_5 = arith.constant dense<0xFF800000> : vector<16xf32>
    %6 = vector.multi_reduction <maximumf>, %5, %cst_5 [1] : vector<16x128xf32> to vector<16xf32>
    %7 = vector.shape_cast %6 : vector<16xf32> to vector<16x1xf32>
    %8 = vector.broadcast %7 : vector<16x1xf32> to vector<16x128xf32>
    %9 = arith.subf %5, %8 : vector<16x128xf32>
    %10 = math.exp %9 : vector<16x128xf32>
    %cst_6 = arith.constant dense<0.000000e+00> : vector<16xf32>
    %11 = vector.multi_reduction <add>, %10, %cst_6 [1] : vector<16x128xf32> to vector<16xf32>
    %12 = vector.shape_cast %11 : vector<16xf32> to vector<16x1xf32>
    %13 = math.log %12 : vector<16x1xf32>
    %14 = vector.broadcast %13 : vector<16x1xf32> to vector<16x128xf32>
    %15 = arith.subf %9, %14 : vector<16x128xf32>
    %c0_7 = arith.constant 0 : index
    %c0_8 = arith.constant 0 : index
    %16 = vector.load %arg4[%c0_7, %c0_8] : memref<16x128xf32, #tpu.memory_space<vmem>>, vector<16x128xf32>
    tpu.vector_store %arg4[%c0_7, %c0_8], %15 {strides = array<i32>} : memref<16x128xf32, #tpu.memory_space<vmem>>, vector<16x128xf32>,
    return
  }
  func.func @transform_0(%arg0: i32) -> (i32, i32) {
    %c0_i32 = arith.constant 0 : i32
    %c0_i32_0 = arith.constant 0 : i32
    return %arg0, %c0_i32 : i32, i32
  }
  func.func @transform_1(%arg0: i32) -> (i32, i32) {
    %c0_i32 = arith.constant 0 : i32
    %c0_i32_0 = arith.constant 0 : i32
    %c0_i32_1 = arith.constant 0 : i32
    return %c0_i32, %c0_i32_0 : i32, i32
  }
  func.func @transform_2(%arg0: i32) -> (i32, i32) {
    %c0_i32 = arith.constant 0 : i32
    %c0_i32_0 = arith.constant 0 : i32
    %c0_i32_1 = arith.constant 0 : i32
    return %c0_i32, %c0_i32_0 : i32, i32
  }
  func.func @transform_3(%arg0: i32) -> (i32, i32) {
    %c0_i32 = arith.constant 0 : i32
    %c0_i32_0 = arith.constant 0 : i32
    return %arg0, %c0_i32 : i32, i32
  }
}

</mosaic_0001>

<llo_original>
// kernel: fully_connected_classifier.1
$region0: #{fully_connected_classifier.1}
  #allocation0 [shape = 'u32[]', space=smem, size = 0x4, offset = 0x4, fixed_abs, tag = 'smem constant byte address 0x4 - core index']
  #allocation1 [shape = 'u32[144,128]{1,0:T(1,128)}', space=vmem, size = 0x12000, scoped, tag = 'internal scratch']
  %s0 = inlined_call_operand.vmem [shape: bf16[16,32], index: 0, kind: input, shape index: {}]
  %s1 = inlined_call_operand.vmem [shape: bf16[32,128], index: 1, kind: input, shape index: {}]
  %s2 = inlined_call_operand.vmem [shape: f32[1,128], index: 2, kind: input, shape index: {}]
  %s3 = inlined_call_operand.vmem [shape: f32[16,128], index: 3, kind: output, shape index: {}]
  %s4 = sld [smem:[#allocation0]]
  $region22: #{fully_connected_classifier.1} parent=0
    _
  %s6 = ssub.s32 1, %s4
  %s7 = scalar_select 0, %s6, %s4
  // Predicated region
  $region2: #{fully_connected_classifier.1} parent=0 // pred_check
    _
  $region3: #{fully_connected_classifier.1} parent=0 // pred_check_branch
    %9 = sbr.rel (0) target = $region5
  $region4: #{fully_connected_classifier.1} parent=0 // pred_region
    _
  $region5: #{fully_connected_classifier.1} parent=0 // pred_fallthru
    _
  // Predicated region
  $region6: #{fully_connected_classifier.1} parent=0 // pred_check
    _
  $region7: #{fully_connected_classifier.1} parent=0 // pred_check_branch
    %11 = sbr.rel (0) target = $region9
  $region8: #{fully_connected_classifier.1} parent=0 // pred_region
    _
  $region9: #{fully_connected_classifier.1} parent=0 // pred_fallthru
    _
  // Predicated region
  $region10: #{fully_connected_classifier.1} parent=0 // pred_check
    _
  $region11: #{fully_connected_classifier.1} parent=0 // pred_check_branch
    %13 = sbr.rel (0) target = $region13
  $region12: #{fully_connected_classifier.1} parent=0 // pred_region
    _
  $region13: #{fully_connected_classifier.1} parent=0 // pred_fallthru
    _
  %v15 = vld [vmem:[%s0] sm:$0xf]
  %v16 = vld [vmem:[%s0 + $0x4] sm:$0xf]
  %v17 = vld [vmem:[%s1] sm:$0xf]
  %v18 = vld [vmem:[%s1 + $0x4] sm:$0xf]
  %v19 = vld [vmem:[%s1 + $0x8] sm:$0xf]
  %v20 = vld [vmem:[%s1 + $0xc] sm:$0xf]
  %v21 = vld [vmem:[%s2] sm:$0x1]
  %v23 = vlaneseq
  %v24 = vshrl.u32 %v23, 7
  %v25 = vsub.s32 0, %v24
  %v26 = vrot.slane %v21, %v25
  %v30 = vunpack.c.l.b16 %v15
  %v31 = vunpack.c.l.b16 %v16
  %v32 = vpack.c.b16 %v31, %v30
  %v37 = vunpack.c.l.b16 %v17
  %v38 = vunpack.c.l.b16 %v18
  %v39 = vunpack.c.l.b16 %v19
  %v40 = vunpack.c.l.b16 %v20
  %v41 = vpack.c.b16 %v38, %v37
  %v42 = vpack.c.b16 %v40, %v39
  %vm45 = vcmask 261120
  %v47 = vsel %vm45, %v32, 0
  %49 = vmatprep.subr.bf16.mxu0 0
  %50 = vmatpush1.bf16.msra.mxu0 %v41
  %51 = vmatprep.subr.bf16.mxu0 0
  %52 = vmatpush1.bf16.msra.mxu0 %v42
  %53 = vmatprep.subr.bf16.mxu0 0
  %54 = vmatpush1.bf16.msra.mxu0 0
  %55 = vmatprep.subr.bf16.mxu0 0
  %56 = vmatpush1.bf16.msra.mxu0 0
  %57 = vmatprep.subr.bf16.mxu0 0
  %58 = vmatpush1.bf16.msra.mxu0 0
  %59 = vmatprep.subr.bf16.mxu0 0
  %60 = vmatpush1.bf16.msra.mxu0 0
  %61 = vmatprep.subr.bf16.mxu0 0
  %62 = vmatpush1.bf16.msra.mxu0 0
  %63 = vmatprep.subr.bf16.mxu0 0
  %64 = vmatpush1.bf16.msra.mxu0 0
  %65 = vmatprep.subr.bf16.mxu0 0
  %66 = vmatpush1.bf16.msra.mxu0 0
  %67 = vmatprep.subr.bf16.mxu0 0
  %68 = vmatpush1.bf16.msra.mxu0 0
  %69 = vmatprep.subr.bf16.mxu0 0
  %70 = vmatpush1.bf16.msra.mxu0 0
  %71 = vmatprep.subr.bf16.mxu0 0
  %72 = vmatpush1.bf16.msra.mxu0 0
  %73 = vmatprep.subr.bf16.mxu0 0
  %74 = vmatpush1.bf16.msra.mxu0 0
  %75 = vmatprep.subr.bf16.mxu0 0
  %76 = vmatpush1.bf16.msra.mxu0 0
  %77 = vmatprep.subr.bf16.mxu0 0
  %78 = vmatpush1.bf16.msra.mxu0 0
  %79 = vmatprep.subr.bf16.mxu0 0
  %80 = vmatpush1.bf16.msra.mxu0 0
  %81 = vmatprep.mubr.bf16.mxu0 0
  %82 = vmatmul.mubr.bf16.gmra.mrb[0].mxu0 %v47
  %v83 = vpop.f32.mrb[0].mxu0
  %v84 = vadd.f32 %v26, %v83
  %v85 = vpop.f32.mrb[0].mxu0
  %v86 = vpop.f32.mrb[0].mxu0
  %v87 = vadd.f32 %v26, %v86
  %v88 = vpop.f32.mrb[0].mxu0
  %89 = vdwg.mxu0
  %90 = vmax.xlane.f32.xlu0 %v84
  %v91 = vpop.xlane.xlu0 %90
  %92 = vmax.xlane.f32.xlu0 %v87
  %v93 = vpop.xlane.xlu0 %92
  %v94 = vsub.f32 %v84, %v91
  %v95 = vsub.f32 %v87, %v93
  %v96 = vmul.f32 %v94, 1.442695
  %v97 = vpow.pop %v96
  %v98 = vmul.f32 %v95, 1.442695
  %v99 = vpow.pop %v98
  %100 = vadd.xlane.f32.xlu0 %v97
  %v101 = vpop.xlane.xlu0 %100
  %102 = vadd.xlane.f32.xlu0 %v99
  %v103 = vpop.xlane.xlu0 %102
  %v104 = vlog2.pop %v101
  %v105 = vmul.f32 %v104, 0.6931472
  %v106 = vlog2.pop %v103
  %v107 = vmul.f32 %v106, 0.6931472
  %v108 = vsub.f32 %v94, %v105
  %v109 = vsub.f32 %v95, %v107
  %110 = vst [vmem:[%s3] sm:$0xff] %v108
  %111 = vst [vmem:[%s3 + $0x8] sm:$0xff] %v109
  // Predicated region
  $region14: #{fully_connected_classifier.1} parent=0 // pred_check
    _
  $region15: #{fully_connected_classifier.1} parent=0 // pred_check_branch
    %113 = sbr.rel (0) target = $region17
  $region16: #{fully_connected_classifier.1} parent=0 // pred_region
    _
  $region17: #{fully_connected_classifier.1} parent=0 // pred_fallthru
    _
  // Predicated region
  $region18: #{fully_connected_classifier.1} parent=0 // pred_check
    _
  $region19: #{fully_connected_classifier.1} parent=0 // pred_check_branch
    %115 = sbr.rel (0) target = $region21
  $region20: #{fully_connected_classifier.1} parent=0 // pred_region
    _
  $region21: #{fully_connected_classifier.1} parent=0 // pred_fallthru
    _

</llo_original>
